<compile_context>
chip_gen: v5e
topology: v5e:2x2
jax: 0.10.0
libtpu: 0.0.40
codegen_flags: <defaults>
</compile_context>

<pallas_src>
import jax
import jax.numpy as jnp
from jax.experimental import pallas as pl
from jax.experimental.pallas import tpu as pltpu


def _round_up(a: int, b: int) -> int:
    return (a + b - 1) // b * b


def _proj_lse_kernel(x_ref, w_ref, b_ref, logits_ref, lse_ref, m_ref, l_ref):
    """Grid (i, j): logits tile = x_i @ w_j + b_j (bf16 MXU, f32 accumulate).

    Raw logits are written out per (i, j) tile; a running (max, scaled-sum-exp)
    over the vocab axis lives in VMEM scratch.  At the last vocab tile the
    per-row logsumexp is emitted (its output block index is constant over j, so
    it stays resident in VMEM until then).
    """
    j = pl.program_id(1)

    @pl.when(j == 0)
    def _init():
        m_ref[...] = jnp.full_like(m_ref, -jnp.inf)
        l_ref[...] = jnp.zeros_like(l_ref)

    logits = jnp.dot(x_ref[...], w_ref[...], preferred_element_type=jnp.float32)
    logits = logits + b_ref[...]                      # (tm, tv) f32
    logits_ref[...] = logits                          # stash raw logits

    # Online logsumexp across vocab tiles (f32; exp/log land on the EUP slot).
    m_prev = m_ref[...]
    m_new = jnp.maximum(m_prev, jnp.max(logits, axis=-1, keepdims=True))
    l_ref[...] = (l_ref[...] * jnp.exp(m_prev - m_new)
                  + jnp.sum(jnp.exp(logits - m_new), axis=-1, keepdims=True))
    m_ref[...] = m_new

    @pl.when(j == pl.num_programs(1) - 1)
    def _finalize():
        lse = m_ref[...] + jnp.log(l_ref[...])        # (tm, 1)
        lse_ref[...] = jnp.broadcast_to(lse, lse_ref.shape)


def _normalize_kernel(logits_ref, lse_ref, o_ref):
    # log_softmax = logits - logsumexp(row)
    o_ref[...] = (logits_ref[...] - lse_ref[:, 0:1]).astype(o_ref.dtype)


def projection_layer(x, weight, bias, *, tm=256, tv=1024,
                     compute_dtype=jnp.bfloat16, out_dtype=jnp.float32):
    """x: (B, S, D); weight: (D, V); bias: (V,). Returns (B, S, V) log-probs."""
    assert tm % 8 == 0 and tv % 128 == 0
    B, S, D = x.shape
    Dw, V = weight.shape
    assert Dw == D and bias.shape == (V,)
    M = B * S

    # Clamp tiles to (padded) problem size; pad instead of asserting divisibility.
    tm_eff = min(tm, _round_up(M, 16))
    tv_eff = min(tv, _round_up(V, 128))
    M_pad = _round_up(M, tm_eff)
    V_pad = _round_up(V, tv_eff)
    nm, nv = M_pad // tm_eff, V_pad // tv_eff

    x2d = x.reshape(M, D)
    if M_pad > M:
        x2d = jnp.pad(x2d, ((0, M_pad - M), (0, 0)))
    w2d, b1d = weight, bias
    if V_pad > V:
        w2d = jnp.pad(w2d, ((0, 0), (0, V_pad - V)))
        # Padded vocab columns get a huge negative bias so they vanish under softmax.
        b1d = jnp.pad(b1d, (0, V_pad - V), constant_values=-1e30)

    x2d = x2d.astype(compute_dtype)          # bf16 MXU operands, f32 accumulate
    w2d = w2d.astype(compute_dtype)
    b2d = b1d.astype(jnp.float32).reshape(1, V_pad)

    cb = jnp.result_type(compute_dtype).itemsize
    ob = jnp.result_type(out_dtype).itemsize
    f32 = 4

    def _limit(nbytes):
        return int(min(2 * nbytes + (2 << 20), 110 << 20))

    vmem_a = (2 * tm_eff * D * cb          # x tile (double-buffered)
              + 2 * D * tv_eff * cb        # weight tile
              + 2 * tv_eff * f32           # bias tile
              + 2 * tm_eff * tv_eff * f32  # logits output tile
              + 2 * tm_eff * 128 * f32     # lse output block
              + 2 * tm_eff * 128 * f32)    # m/l scratch (lane-padded)
    vmem_b = (2 * tm_eff * tv_eff * f32 + 2 * tm_eff * 128 * f32
              + 2 * tm_eff * tv_eff * ob)

    # Kernel A: tiled matmul + bias + online logsumexp over the vocab axis.
    logits_pad, lse_pad = pl.pallas_call(
        _proj_lse_kernel,
        out_shape=(jax.ShapeDtypeStruct((M_pad, V_pad), jnp.float32),
                   jax.ShapeDtypeStruct((M_pad, 128), jnp.float32)),
        grid_spec=pltpu.PrefetchScalarGridSpec(
            num_scalar_prefetch=0,
            grid=(nm, nv),                                   # vocab axis last
            in_specs=[
                pl.BlockSpec((tm_eff, D), lambda i, j: (i, 0)),
                pl.BlockSpec((D, tv_eff), lambda i, j: (0, j)),
                pl.BlockSpec((1, tv_eff), lambda i, j: (0, j)),
            ],
            out_specs=[
                pl.BlockSpec((tm_eff, tv_eff), lambda i, j: (i, j)),
                pl.BlockSpec((tm_eff, 128), lambda i, j: (i, 0)),
            ],
            scratch_shapes=[pltpu.VMEM((tm_eff, 1), jnp.float32),
                            pltpu.VMEM((tm_eff, 1), jnp.float32)],
        ),
        compiler_params=pltpu.CompilerParams(
            dimension_semantics=("parallel", "arbitrary"),
            vmem_limit_bytes=_limit(vmem_a),
        ),
    )(x2d, w2d, b2d)

    # Kernel B: normalize (logits - lse), written in place over the logits buffer.
    alias = {0: 0} if jnp.result_type(out_dtype) == jnp.float32 else {}
    out_pad = pl.pallas_call(
        _normalize_kernel,
        out_shape=jax.ShapeDtypeStruct((M_pad, V_pad), out_dtype),
        grid_spec=pltpu.PrefetchScalarGridSpec(
            num_scalar_prefetch=0,
            grid=(nm, nv),
            in_specs=[
                pl.BlockSpec((tm_eff, tv_eff), lambda i, j: (i, j)),
                pl.BlockSpec((tm_eff, 128), lambda i, j: (i, 0)),
            ],
            out_specs=pl.BlockSpec((tm_eff, tv_eff), lambda i, j: (i, j)),
        ),
        input_output_aliases=alias,
        compiler_params=pltpu.CompilerParams(
            dimension_semantics=("parallel", "parallel"),
            vmem_limit_bytes=_limit(vmem_b),
        ),
    )(logits_pad, lse_pad)

    return out_pad[:M, :V].reshape(B, S, V)


if __name__ == "__main__":
    # Small shapes consistent with the module: batch=2, seq=8, d_model=32, vocab=128.
    batch, seq, d_model, vocab_size = 2, 8, 32, 128

    key = jax.random.PRNGKey(0)
    kx, kw, kb = jax.random.split(key, 3)

    x = jax.random.normal(kx, (batch, seq, d_model), dtype=jnp.float32)
    bound = 1.0 / (d_model ** 0.5)
    weight = jax.random.uniform(kw, (d_model, vocab_size), jnp.float32, -bound, bound)
    bias = jax.random.uniform(kb, (vocab_size,), jnp.float32, -bound, bound)

    proj = jax.jit(projection_layer)
    out = proj(x, weight, bias)
    jax.block_until_ready(out)
    assert out.shape == (batch, seq, vocab_size)

    # Tight check vs a reference using the same bf16-rounded MXU operands (f32 accumulate).
    xb = x.astype(jnp.bfloat16).astype(jnp.float32)
    wb = weight.astype(jnp.bfloat16).astype(jnp.float32)
    ref_bf16 = jax.nn.log_softmax(
        jnp.einsum("bsd,dv->bsv", xb, wb, precision=jax.lax.Precision.HIGHEST) + bias,
        axis=-1)
    assert jnp.allclose(out, ref_bf16, atol=5e-4, rtol=5e-4), \
        float(jnp.max(jnp.abs(out - ref_bf16)))

    # Loose check vs the full-f32 torch-equivalent reference (bf16 operand rounding only).
    ref_f32 = jax.nn.log_softmax(
        jnp.einsum("bsd,dv->bsv", x, weight, precision=jax.lax.Precision.HIGHEST) + bias,
        axis=-1)
    assert jnp.allclose(out, ref_f32, atol=1e-1), float(jnp.max(jnp.abs(out - ref_f32)))

    # Ragged shapes exercise the padding path (M=18 rows, V=200 vocab -> padded tiles).
    x2 = jax.random.normal(kx, (2, 9, d_model), dtype=jnp.float32)
    w2 = jax.random.uniform(kw, (d_model, 200), jnp.float32, -bound, bound)
    b2 = jax.random.uniform(kb, (200,), jnp.float32, -bound, bound)
    out2 = proj(x2, w2, b2)
    jax.block_until_ready(out2)
    assert out2.shape == (2, 9, 200)
    ref2 = jax.nn.log_softmax(
        jnp.einsum("bsd,dv->bsv", x2.astype(jnp.bfloat16).astype(jnp.float32),
                   w2.astype(jnp.bfloat16).astype(jnp.float32),
                   precision=jax.lax.Precision.HIGHEST) + b2, axis=-1)
    assert jnp.allclose(out2, ref2, atol=5e-4, rtol=5e-4), \
        float(jnp.max(jnp.abs(out2 - ref2)))

    print("KERNEL_OK")
</pallas_src>

<mosaic_0001>
module attributes {stable_mosaic.version = 11 : i64} {
  func.func @_normalize_kernel(%arg0: i32, %arg1: i32, %arg2: memref<16x128xf32, #tpu.memory_space<vmem>>, %arg3: memref<16x128xf32, #tpu.memory_space<vmem>>, %arg4: memref<16x128xf32, #tpu.memory_space<vmem>>) attributes {dimension_semantics = [#tpu.dimension_semantics<parallel>, #tpu.dimension_semantics<parallel>], iteration_bounds = array<i64: 1, 1>, scalar_prefetch = 0 : i64, scratch_operands = 0 : i64, tpu.core_type = #tpu.core_type<tc>, window_params = [{transform_indices = @transform_0, window_bounds = array<i64: 16, 128>}, {transform_indices = @transform_1, window_bounds = array<i64: 16, 128>}, {transform_indices = @transform_2, window_bounds = array<i64: 16, 128>}]} {
    %c0 = arith.constant 0 : index
    %c0_0 = arith.constant 0 : index
    %0 = vector.load %arg2[%c0, %c0_0] : memref<16x128xf32, #tpu.memory_space<vmem>>, vector<16x128xf32>
    %c0_1 = arith.constant 0 : index
    %c0_2 = arith.constant 0 : index
    %1 = vector.load %arg3[%c0_1, %c0_2] : memref<16x128xf32, #tpu.memory_space<vmem>>, vector<16x1xf32>
    %2 = vector.broadcast %1 : vector<16x1xf32> to vector<16x128xf32>
    %3 = arith.subf %0, %2 : vector<16x128xf32>
    %c0_3 = arith.constant 0 : index
    %c0_4 = arith.constant 0 : index
    %4 = vector.load %arg4[%c0_3, %c0_4] : memref<16x128xf32, #tpu.memory_space<vmem>>, vector<16x128xf32>
    tpu.vector_store %arg4[%c0_3, %c0_4], %3 {strides = array<i32>} : memref<16x128xf32, #tpu.memory_space<vmem>>, vector<16x128xf32>,
    return
  }
  func.func @transform_0(%arg0: i32, %arg1: i32) -> (i32, i32) {
    %c0_i32 = arith.constant 0 : i32
    return %arg0, %arg1 : i32, i32
  }
  func.func @transform_1(%arg0: i32, %arg1: i32) -> (i32, i32) {
    %c0_i32 = arith.constant 0 : i32
    %c0_i32_0 = arith.constant 0 : i32
    return %arg0, %c0_i32 : i32, i32
  }
  func.func @transform_2(%arg0: i32, %arg1: i32) -> (i32, i32) {
    %c0_i32 = arith.constant 0 : i32
    return %arg0, %arg1 : i32, i32
  }
}

module attributes {stable_mosaic.version = 11 : i64} {
  func.func @_proj_lse_kernel(%arg0: i32, %arg1: i32, %arg2: memref<16x32xbf16, #tpu.memory_space<vmem>>, %arg3: memref<32x128xbf16, #tpu.memory_space<vmem>>, %arg4: memref<1x128xf32, #tpu.memory_space<vmem>>, %arg5: memref<16x128xf32, #tpu.memory_space<vmem>>, %arg6: memref<16x128xf32, #tpu.memory_space<vmem>>, %arg7: memref<16x1xf32, #tpu.memory_space<vmem>>, %arg8: memref<16x1xf32, #tpu.memory_space<vmem>>) attributes {dimension_semantics = [#tpu.dimension_semantics<parallel>, #tpu.dimension_semantics<arbitrary>], iteration_bounds = array<i64: 1, 1>, scalar_prefetch = 0 : i64, scratch_operands = 2 : i64, tpu.core_type = #tpu.core_type<tc>, window_params = [{transform_indices = @transform_0, window_bounds = array<i64: 16, 32>}, {transform_indices = @transform_1, window_bounds = array<i64: 32, 128>}, {transform_indices = @transform_2, window_bounds = array<i64: 1, 128>}, {transform_indices = @transform_3, window_bounds = array<i64: 16, 128>}, {transform_indices = @transform_4, window_bounds = array<i64: 16, 128>}]} {
    %c0_i32 = arith.constant 0 : i32
    %0 = arith.cmpi eq, %arg1, %c0_i32 : i32
    %1 = arith.extui %0 : i1 to i32
    %c0_i32_0 = arith.constant 0 : i32
    %2 = arith.cmpi ne, %1, %c0_i32_0 : i32
    scf.if %2 {
      %cst_20 = arith.constant 0xFF800000 : f32
      %29 = vector.broadcast %cst_20 : f32 to vector<16x1xf32>
      %c0_21 = arith.constant 0 : index
      %c0_22 = arith.constant 0 : index
      %30 = vector.load %arg7[%c0_21, %c0_22] : memref<16x1xf32, #tpu.memory_space<vmem>>, vector<16x1xf32>
      tpu.vector_store %arg7[%c0_21, %c0_22], %29 {strides = array<i32>} : memref<16x1xf32, #tpu.memory_space<vmem>>, vector<16x1xf32>,
      %cst_23 = arith.constant 0.000000e+00 : f32
      %31 = vector.broadcast %cst_23 : f32 to vector<16x1xf32>
      %c0_24 = arith.constant 0 : index
      %c0_25 = arith.constant 0 : index
      %32 = vector.load %arg8[%c0_24, %c0_25] : memref<16x1xf32, #tpu.memory_space<vmem>>, vector<16x1xf32>
      tpu.vector_store %arg8[%c0_24, %c0_25], %31 {strides = array<i32>} : memref<16x1xf32, #tpu.memory_space<vmem>>, vector<16x1xf32>,
    } else {
    }
    %c0 = arith.constant 0 : index
    %c0_1 = arith.constant 0 : index
    %3 = vector.load %arg2[%c0, %c0_1] : memref<16x32xbf16, #tpu.memory_space<vmem>>, vector<16x32xbf16>
    %c0_2 = arith.constant 0 : index
    %c0_3 = arith.constant 0 : index
    %4 = vector.load %arg3[%c0_2, %c0_3] : memref<32x128xbf16, #tpu.memory_space<vmem>>, vector<32x128xbf16>
    %cst = arith.constant dense<0.000000e+00> : vector<16x128xf32>
    %5 = tpu.matmul %3, %4, %cst {dimension_numbers = #tpu.dot_dimension_numbers<[1], [0], [0], [1], [0, 0, 1, 1], [], []>} : vector<16x32xbf16>, vector<32x128xbf16>, vector<16x128xf32> -> vector<16x128xf32>
    %c0_4 = arith.constant 0 : index
    %c0_5 = arith.constant 0 : index
    %6 = vector.load %arg4[%c0_4, %c0_5] : memref<1x128xf32, #tpu.memory_space<vmem>>, vector<1x128xf32>
    %7 = vector.broadcast %6 : vector<1x128xf32> to vector<16x128xf32>
    %8 = arith.addf %5, %7 : vector<16x128xf32>
    %c0_6 = arith.constant 0 : index
    %c0_7 = arith.constant 0 : index
    %9 = vector.load %arg5[%c0_6, %c0_7] : memref<16x128xf32, #tpu.memory_space<vmem>>, vector<16x128xf32>
    tpu.vector_store %arg5[%c0_6, %c0_7], %8 {strides = array<i32>} : memref<16x128xf32, #tpu.memory_space<vmem>>, vector<16x128xf32>,
    %c0_8 = arith.constant 0 : index
    %c0_9 = arith.constant 0 : index
    %10 = vector.load %arg7[%c0_8, %c0_9] : memref<16x1xf32, #tpu.memory_space<vmem>>, vector<16x1xf32>
    %cst_10 = arith.constant dense<0xFF800000> : vector<16xf32>
    %11 = vector.multi_reduction <maximumf>, %8, %cst_10 [1] : vector<16x128xf32> to vector<16xf32>
    %12 = vector.shape_cast %11 : vector<16xf32> to vector<16x1xf32>
    %13 = arith.maximumf %10, %12 : vector<16x1xf32>
    %c0_11 = arith.constant 0 : index
    %c0_12 = arith.constant 0 : index
    %14 = vector.load %arg8[%c0_11, %c0_12] : memref<16x1xf32, #tpu.memory_space<vmem>>, vector<16x1xf32>
    %15 = arith.subf %10, %13 : vector<16x1xf32>
    %16 = math.exp %15 : vector<16x1xf32>
    %17 = arith.mulf %14, %16 : vector<16x1xf32>
    %18 = vector.broadcast %13 : vector<16x1xf32> to vector<16x128xf32>
    %19 = arith.subf %8, %18 : vector<16x128xf32>
    %20 = math.exp %19 : vector<16x128xf32>
    %cst_13 = arith.constant dense<0.000000e+00> : vector<16xf32>
    %21 = vector.multi_reduction <add>, %20, %cst_13 [1] : vector<16x128xf32> to vector<16xf32>
    %22 = vector.shape_cast %21 : vector<16xf32> to vector<16x1xf32>
    %23 = arith.addf %17, %22 : vector<16x1xf32>
    %c0_14 = arith.constant 0 : index
    %c0_15 = arith.constant 0 : index
    %24 = vector.load %arg8[%c0_14, %c0_15] : memref<16x1xf32, #tpu.memory_space<vmem>>, vector<16x1xf32>
    tpu.vector_store %arg8[%c0_14, %c0_15], %23 {strides = array<i32>} : memref<16x1xf32, #tpu.memory_space<vmem>>, vector<16x1xf32>,
    %c0_16 = arith.constant 0 : index
    %c0_17 = arith.constant 0 : index
    %25 = vector.load %arg7[%c0_16, %c0_17] : memref<16x1xf32, #tpu.memory_space<vmem>>, vector<16x1xf32>
    tpu.vector_store %arg7[%c0_16, %c0_17], %13 {strides = array<i32>} : memref<16x1xf32, #tpu.memory_space<vmem>>, vector<16x1xf32>,
    %c0_i32_18 = arith.constant 0 : i32
    %26 = arith.cmpi eq, %arg1, %c0_i32_18 : i32
    %27 = arith.extui %26 : i1 to i32
    %c0_i32_19 = arith.constant 0 : i32
    %28 = arith.cmpi ne, %27, %c0_i32_19 : i32
    scf.if %28 {
      %c0_20 = arith.constant 0 : index
      %c0_21 = arith.constant 0 : index
      %29 = vector.load %arg7[%c0_20, %c0_21] : memref<16x1xf32, #tpu.memory_space<vmem>>, vector<16x1xf32>
      %c0_22 = arith.constant 0 : index
      %c0_23 = arith.constant 0 : index
      %30 = vector.load %arg8[%c0_22, %c0_23] : memref<16x1xf32, #tpu.memory_space<vmem>>, vector<16x1xf32>
      %31 = math.log %30 : vector<16x1xf32>
      %32 = arith.addf %29, %31 : vector<16x1xf32>
      %33 = vector.shape_cast %32 : vector<16x1xf32> to vector<16x1xf32>
      %34 = vector.broadcast %33 : vector<16x1xf32> to vector<16x128xf32>
      %c0_24 = arith.constant 0 : index
      %c0_25 = arith.constant 0 : index
      %35 = vector.load %arg6[%c0_24, %c0_25] : memref<16x128xf32, #tpu.memory_space<vmem>>, vector<16x128xf32>
      tpu.vector_store %arg6[%c0_24, %c0_25], %34 {strides = array<i32>} : memref<16x128xf32, #tpu.memory_space<vmem>>, vector<16x128xf32>,
    } else {
    }
    return
  }
  func.func @transform_0(%arg0: i32, %arg1: i32) -> (i32, i32) {
    %c0_i32 = arith.constant 0 : i32
    %c0_i32_0 = arith.constant 0 : i32
    return %arg0, %c0_i32 : i32, i32
  }
  func.func @transform_1(%arg0: i32, %arg1: i32) -> (i32, i32) {
    %c0_i32 = arith.constant 0 : i32
    %c0_i32_0 = arith.constant 0 : i32
    return %c0_i32, %arg1 : i32, i32
  }
  func.func @transform_2(%arg0: i32, %arg1: i32) -> (i32, i32) {
    %c0_i32 = arith.constant 0 : i32
    %c0_i32_0 = arith.constant 0 : i32
    return %c0_i32, %arg1 : i32, i32
  }
  func.func @transform_3(%arg0: i32, %arg1: i32) -> (i32, i32) {
    %c0_i32 = arith.constant 0 : i32
    return %arg0, %arg1 : i32, i32
  }
  func.func @transform_4(%arg0: i32, %arg1: i32) -> (i32, i32) {
    %c0_i32 = arith.constant 0 : i32
    %c0_i32_0 = arith.constant 0 : i32
    return %arg0, %c0_i32 : i32, i32
  }
}

</mosaic_0001>

<llo_original>
// kernel: projection_layer.3
$region0: #{projection_layer.3}
  #allocation0 [shape = 'u32[]', space=smem, size = 0x4, offset = 0x4, fixed_abs, tag = 'smem constant byte address 0x4 - core index']
  #allocation1 [shape = 'u32[72,128]{1,0:T(1,128)}', space=vmem, size = 0x9000, scoped, tag = 'internal scratch']
  %s0 = inlined_call_operand.vmem [shape: f32[16,128], index: 0, kind: input, shape index: {}, may-alias: {0,2}]
  %s1 = inlined_call_operand.vmem [shape: f32[16,128], index: 1, kind: input, shape index: {}]
  %s2 = inlined_call_operand.vmem [shape: f32[16,128], index: 2, kind: output, shape index: {}, may-alias: {0,2}]
  %s3 = sld [smem:[#allocation0]]
  $region18: #{projection_layer.3} parent=0
    _
  %s5 = ssub.s32 1, %s3
  %s6 = scalar_select 0, %s5, %s3
  // Predicated region
  $region2: #{projection_layer.3} parent=0 // pred_check
    _
  $region3: #{projection_layer.3} parent=0 // pred_check_branch
    %8 = sbr.rel (0) target = $region5
  $region4: #{projection_layer.3} parent=0 // pred_region
    _
  $region5: #{projection_layer.3} parent=0 // pred_fallthru
    _
  // Predicated region
  $region6: #{projection_layer.3} parent=0 // pred_check
    _
  $region7: #{projection_layer.3} parent=0 // pred_check_branch
    %10 = sbr.rel (0) target = $region9
  $region8: #{projection_layer.3} parent=0 // pred_region
    _
  $region9: #{projection_layer.3} parent=0 // pred_fallthru
    _
  %v11 = vld [vmem:[%s0] sm:$0xff]
  %v12 = vld [vmem:[%s0 + $0x8] sm:$0xff]
  %v13 = vld [vmem:[%s1] sm:$0xff]
  %v14 = vld [vmem:[%s1 + $0x8] sm:$0xff]
  %16 = vset.pattern.permute.xlu0 0
  %17 = vperm.xlu0 %16, %v13
  %v18 = vpop.permute.xlu0 %17
  %21 = vset.pattern.permute.xlu0 0
  %22 = vperm.xlu0 %21, %v14
  %v23 = vpop.permute.xlu0 %22
  %v25 = vsub.f32 %v11, %v18
  %v26 = vsub.f32 %v12, %v23
  %27 = vst [vmem:[%s2] sm:$0xff] %v25
  %28 = vst [vmem:[%s2 + $0x8] sm:$0xff] %v26
  // Predicated region
  $region10: #{projection_layer.3} parent=0 // pred_check
    _
  $region11: #{projection_layer.3} parent=0 // pred_check_branch
    %30 = sbr.rel (0) target = $region13
  $region12: #{projection_layer.3} parent=0 // pred_region
    _
  $region13: #{projection_layer.3} parent=0 // pred_fallthru
    _
  // Predicated region
  $region14: #{projection_layer.3} parent=0 // pred_check
    _
  $region15: #{projection_layer.3} parent=0 // pred_check_branch
    %32 = sbr.rel (0) target = $region17
  $region16: #{projection_layer.3} parent=0 // pred_region
    _
  $region17: #{projection_layer.3} parent=0 // pred_fallthru
    _

// kernel: projection_layer.2
$region0: #{projection_layer.2}
  #allocation0 [shape = 'u32[]', space=smem, size = 0x4, offset = 0x4, fixed_abs, tag = 'smem constant byte address 0x4 - core index']
  #allocation1 [shape = 'u32[72,128]{1,0:T(1,128)}', space=vmem, size = 0x9000, scoped, tag = 'internal scratch']
  #allocation2 [shape = 'f32[16,1]{1,0:T(8,128)}', space=vmem, size = 0x2000, scoped, tag = 'scratch operand']
  #allocation3 [shape = 'f32[16,1]{1,0:T(8,128)}', space=vmem, size = 0x2000, scoped, tag = 'scratch operand']
  %s0 = inlined_call_operand.vmem [shape: bf16[16,32], index: 0, kind: input, shape index: {}]
  %s1 = inlined_call_operand.vmem [shape: bf16[32,128], index: 1, kind: input, shape index: {}]
  %s2 = inlined_call_operand.vmem [shape: f32[1,128], index: 2, kind: input, shape index: {}]
  %s3 = inlined_call_operand.vmem [shape: f32[16,128], index: 3, kind: output, shape index: {0}]
  %s4 = inlined_call_operand.vmem [shape: f32[16,128], index: 4, kind: output, shape index: {1}]
  %5 = xla_tuple %s3, %s4
  %s6 = sld [smem:[#allocation0]]
  $region38: #{projection_layer.2} parent=0
    _
  %s8 = ssub.s32 1, %s6
  %s9 = scalar_select 0, %s8, %s6
  // Predicated region
  $region2: #{projection_layer.2} parent=0 // pred_check
    _
  $region3: #{projection_layer.2} parent=0 // pred_check_branch
    %11 = sbr.rel (0) target = $region5
  $region4: #{projection_layer.2} parent=0 // pred_region
    _
  $region5: #{projection_layer.2} parent=0 // pred_fallthru
    _
  // Predicated region
  $region6: #{projection_layer.2} parent=0 // pred_check
    _
  $region7: #{projection_layer.2} parent=0 // pred_check_branch
    %13 = sbr.rel (0) target = $region9
  $region8: #{projection_layer.2} parent=0 // pred_region
    _
  $region9: #{projection_layer.2} parent=0 // pred_fallthru
    _
  // Predicated region
  $region10: #{projection_layer.2} parent=0 // pred_check
    _
  $region11: #{projection_layer.2} parent=0 // pred_check_branch
    %15 = sbr.rel (0) target = $region13
  $region12: #{projection_layer.2} parent=0 // pred_region
    _
  $region13: #{projection_layer.2} parent=0 // pred_fallthru
    _
  %p17 = scmp.eq.s32.totalorder 0, 0
  // Predicated region
  $region14: #{projection_layer.2} parent=0 // pred_check
    %p18 = pneg %p17
  $region15: #{projection_layer.2} parent=0 // pred_check_branch
    %20 = sbr.rel (%p18) target = $region17
  $region16: #{projection_layer.2} parent=0 // pred_region
    %vm21 = vcmask 7168
    %22 = vst.msk [vmem:[#allocation2] sm:$0xff] %vm21, -inf
    %23 = vst.msk [vmem:[#allocation2 + $0x8] sm:$0xff] %vm21, -inf
    %24 = vst.msk [vmem:[#allocation3] sm:$0xff] %vm21, 0.0
    %25 = vst.msk [vmem:[#allocation3 + $0x8] sm:$0xff] %vm21, 0.0
  $region17: #{projection_layer.2} parent=0 // pred_fallthru
    _
  %v26 = vld [vmem:[%s0] sm:$0xf]
  %v27 = vld [vmem:[%s0 + $0x4] sm:$0xf]
  %v28 = vld [vmem:[%s1] sm:$0xf]
  %v29 = vld [vmem:[%s1 + $0x4] sm:$0xf]
  %v30 = vld [vmem:[%s1 + $0x8] sm:$0xf]
  %v31 = vld [vmem:[%s1 + $0xc] sm:$0xf]
  %v32 = vld [vmem:[%s2] sm:$0x1]
  %v34 = vperm.slane %v32, 0
  %v38 = vunpack.c.l.b16 %v26
  %v39 = vunpack.c.l.b16 %v27
  %v40 = vpack.c.b16 %v39, %v38
  %v45 = vunpack.c.l.b16 %v28
  %v46 = vunpack.c.l.b16 %v29
  %v47 = vunpack.c.l.b16 %v30
  %v48 = vunpack.c.l.b16 %v31
  %v49 = vpack.c.b16 %v46, %v45
  %v50 = vpack.c.b16 %v48, %v47
  %vm53 = vcmask 261120
  %v55 = vsel %vm53, %v40, 0
  %57 = vmatpush.bf16.msra.mxu0 0
  %58 = vmatpush.bf16.msra.mxu0 0
  %59 = vmatpush.bf16.msra.mxu0 0
  %60 = vmatpush.bf16.msra.mxu0 0
  %61 = vmatpush.bf16.msra.mxu0 0
  %62 = vmatpush.bf16.msra.mxu0 0
  %63 = vmatpush.bf16.msra.mxu0 %v50
  %64 = vmatpush.bf16.msra.mxu0 %v49
  %65 = vmatmul.bf16.gmra.mxu0 %v55
  %v66 = vpop.f32.mrf.mxu0
  %v67 = vadd.f32 %v34, %v66
  %v68 = vpop.f32.mrf.mxu0
  %v69 = vadd.f32 %v34, %v68
  %70 = vdwg.mxu0
  %71 = vst [vmem:[%s3] sm:$0xff] %v67
  %72 = vst [vmem:[%s3 + $0x8] sm:$0xff] %v69
  %v73 = vld [vmem:[#allocation2] sm:$0xff]
  %v74 = vld [vmem:[#allocation2 + $0x8] sm:$0xff]
  %75 = vmax.xlane.f32.xlu0 %v67
  %v76 = vpop.xlane.xlu0 %75
  %77 = vmax.xlane.f32.xlu0 %v69
  %v78 = vpop.xlane.xlu0 %77
  %v79 = vmax.f32 %v73, %v76
  %v80 = vmax.f32 %v74, %v78
  %v81 = vld [vmem:[#allocation3] sm:$0xff]
  %v82 = vld [vmem:[#allocation3 + $0x8] sm:$0xff]
  %v83 = vsub.f32 %v73, %v79
  %v84 = vsub.f32 %v74, %v80
  %v85 = vmul.f32 %v83, 1.442695
  %v86 = vpow.pop %v85
  %v87 = vmul.f32 %v84, 1.442695
  %v88 = vpow.pop %v87
  %v89 = vmul.f32 %v81, %v86
  %v90 = vmul.f32 %v82, %v88
  %92 = vset.pattern.permute.xlu0 0
  %93 = vperm.xlu0 %92, %v79
  %v94 = vpop.permute.xlu0 %93
  %97 = vset.pattern.permute.xlu0 0
  %98 = vperm.xlu0 %97, %v80
  %v99 = vpop.permute.xlu0 %98
  %v101 = vsub.f32 %v67, %v94
  %v102 = vsub.f32 %v69, %v99
  %v103 = vmul.f32 %v101, 1.442695
  %v104 = vpow.pop %v103
  %v105 = vmul.f32 %v102, 1.442695
  %v106 = vpow.pop %v105
  %107 = vadd.xlane.f32.xlu0 %v104
  %v108 = vpop.xlane.xlu0 %107
  %109 = vadd.xlane.f32.xlu0 %v106
  %v110 = vpop.xlane.xlu0 %109
  %v111 = vadd.f32 %v89, %v108
  %v112 = vadd.f32 %v90, %v110
  %vm113 = vcmask 7168
  %114 = vst.msk [vmem:[#allocation3] sm:$0xff] %vm113, %v111
  %115 = vst.msk [vmem:[#allocation3 + $0x8] sm:$0xff] %vm113, %v112
  %116 = vst.msk [vmem:[#allocation2] sm:$0xff] %vm113, %v79
  %117 = vst.msk [vmem:[#allocation2 + $0x8] sm:$0xff] %vm113, %v80
  // Predicated region
  $region18: #{projection_layer.2} parent=0 // pred_check
    %p118 = pneg %p17
  $region19: #{projection_layer.2} parent=0 // pred_check_branch
    %120 = sbr.rel (%p118) target = $region21
  $region20: #{projection_layer.2} parent=0 // pred_region
    %v121 = vld [vmem:[#allocation2] sm:$0xff]
    %v122 = vld [vmem:[#allocation2 + $0x8] sm:$0xff]
    %v123 = vld [vmem:[#allocation3] sm:$0xff]
    %v124 = vld [vmem:[#allocation3 + $0x8] sm:$0xff]
    %v125 = vlog2.pop %v123
    %v126 = vmul.f32 %v125, 0.6931472
    %v127 = vlog2.pop %v124
    %v128 = vmul.f32 %v127, 0.6931472
    %v129 = vadd.f32 %v121, %v126
    %v130 = vadd.f32 %v122, %v128
    %132 = vset.pattern.permute.xlu0 0
    %133 = vperm.xlu0 %132, %v129
    %v134 = vpop.permute.xlu0 %133
    %137 = vset.pattern.permute.xlu0 0
    %138 = vperm.xlu0 %137, %v130
    %v139 = vpop.permute.xlu0 %138
    %141 = vst [vmem:[%s4] sm:$0xff] %v134
    %142 = vst [vmem:[%s4 + $0x8] sm:$0xff] %v139
  $region21: #{projection_layer.2} parent=0 // pred_fallthru
    _
  // Predicated region
  $region22: #{projection_layer.2} parent=0 // pred_check
    _
  $region23: #{projection_layer.2} parent=0 // pred_check_branch
    %144 = sbr.rel (0) target = $region25
  $region24: #{projection_layer.2} parent=0 // pred_region
    _
  $region25: #{projection_layer.2} parent=0 // pred_fallthru
    _
  // Predicated region
  $region26: #{projection_layer.2} parent=0 // pred_check
    _
  $region27: #{projection_layer.2} parent=0 // pred_check_branch
    %146 = sbr.rel (0) target = $region29
  $region28: #{projection_layer.2} parent=0 // pred_region
    _
  $region29: #{projection_layer.2} parent=0 // pred_fallthru
    _
  // Predicated region
  $region30: #{projection_layer.2} parent=0 // pred_check
    _
  $region31: #{projection_layer.2} parent=0 // pred_check_branch
    %148 = sbr.rel (0) target = $region33
  $region32: #{projection_layer.2} parent=0 // pred_region
    _
  $region33: #{projection_layer.2} parent=0 // pred_fallthru
    _
  // Predicated region
  $region34: #{projection_layer.2} parent=0 // pred_check
    _
  $region35: #{projection_layer.2} parent=0 // pred_check_branch
    %150 = sbr.rel (0) target = $region37
  $region36: #{projection_layer.2} parent=0 // pred_region
    _
  $region37: #{projection_layer.2} parent=0 // pred_fallthru
    _

</llo_original>
